<compile_context>
chip_gen: v7x
topology: tpu7x:2x2x1
jax: 0.10.0
libtpu: 0.0.40
codegen_flags: <defaults>
</compile_context>

<pallas_src>
import jax
import jax.numpy as jnp
import numpy as np
from jax import lax
from jax.experimental import pallas as pl
from jax.experimental.pallas import tpu as pltpu  # noqa: F401  (kept for TPU-specific tuning hooks)


def vae_kernel(x_ref, eps_ref,
               w_enc_ref, b_enc_ref,
               w_eh_ref, b_eh_ref,      # fused enc_mean|enc_std head
               w_dec_ref, b_dec_ref,
               w_dh_ref, b_dh_ref,      # fused dec_mean|dec_std head
               losses_ref, z_em_es_ref, dec_heads_ref):
    x = x_ref[...]
    eps = eps_ref[...]
    z_dim = eps.shape[1]
    x_dim = x.shape[1]

    # ---------------- encoder ----------------
    h = jnp.tanh(
        jnp.dot(x.astype(w_enc_ref.dtype), w_enc_ref[...],
                preferred_element_type=jnp.float32) + b_enc_ref[...])
    # one fused [h_dim, 2*z_dim] matmul for both heads
    enc_heads = (jnp.dot(h.astype(w_eh_ref.dtype), w_eh_ref[...],
                         preferred_element_type=jnp.float32) + b_eh_ref[...])
    enc_mean = enc_heads[:, :z_dim]
    enc_std = enc_heads[:, z_dim:]

    # ------------- reparameterized sample -------------
    std = jnp.exp(0.5 * enc_std)
    z = eps * std + enc_mean

    # ---------------- decoder ----------------
    hd = jnp.tanh(
        jnp.dot(z.astype(w_dec_ref.dtype), w_dec_ref[...],
                preferred_element_type=jnp.float32) + b_dec_ref[...])
    # one fused [h_dim, 2*x_dim] matmul for both heads
    dec_heads = (jnp.dot(hd.astype(w_dh_ref.dtype), w_dh_ref[...],
                         preferred_element_type=jnp.float32) + b_dh_ref[...])
    dec_mean = dec_heads[:, :x_dim]
    dec_std = dec_heads[:, x_dim:]

    # ---------------- losses (scalar reductions) ----------------
    # kld_gauss is (faithfully) called with logvar := exp(0.5*enc_std).
    # NOTE: exp(std) = exp(exp(0.5*enc_std)) matches the reference module but
    # is numerically fragile for large enc_std (can overflow to inf).
    kld = -0.5 * jnp.sum(1.0 + std - enc_mean * enc_mean - jnp.exp(std))
    half_log_2pi = jnp.float32(0.5 * np.log(2.0 * np.pi))
    # (x-dm)^2 / (2*exp(ds))  ==  (x-dm)^2 * 0.5*exp(-ds)   (EUP-friendly form)
    nll = jnp.sum(half_log_2pi + 0.5 * dec_std
                  + (x - dec_mean) ** 2 * (0.5 * jnp.exp(-dec_std)))

    # Pack both scalars into one lane-dense (1, 128) row: lane0=kld, lane1=nll.
    lane = lax.broadcasted_iota(jnp.int32, losses_ref.shape, 1)
    losses_ref[...] = jnp.where(lane == 0, kld, jnp.where(lane == 1, nll, 0.0))

    # Pack z | enc_mean | enc_std into one [B, 3*z_dim] slab.
    z_em_es_ref[...] = jnp.concatenate([z, enc_heads], axis=1)
    # dec_mean | dec_std is already one packed [B, 2*x_dim] slab.
    dec_heads_ref[...] = dec_heads


def vae_forward(x, eps, params, *, weights_dtype=jnp.float32):
    """Full VAE forward pass in one Pallas call.

    x:   [B, x_dim] float32
    eps: [B, z_dim] float32  (standard normal noise)
    params: dict of weights ([in, out], PyTorch-transposed) and biases ([1, out]).
    weights_dtype: set to jnp.bfloat16 on v6e/v5e to halve weight DMA bytes and
      use the bf16 MXU path (accumulation stays f32); default f32 matches the
      PyTorch module's numerics exactly.
    """
    B, x_dim = x.shape
    z_dim = eps.shape[1]

    wd = weights_dtype
    w_enc = params["w_enc"].astype(wd)
    w_dec = params["w_dec"].astype(wd)
    # Fuse the two encoder heads and the two decoder heads into single weights.
    w_eh = jnp.concatenate([params["w_em"], params["w_es"]], axis=1).astype(wd)
    b_eh = jnp.concatenate([params["b_em"], params["b_es"]], axis=1)
    w_dh = jnp.concatenate([params["w_dm"], params["w_ds"]], axis=1).astype(wd)
    b_dh = jnp.concatenate([params["b_dm"], params["b_ds"]], axis=1)

    out_shape = (
        jax.ShapeDtypeStruct((1, 128), jnp.float32),          # kld/nll packed row
        jax.ShapeDtypeStruct((B, 3 * z_dim), jnp.float32),    # z | enc_mean | enc_std
        jax.ShapeDtypeStruct((B, 2 * x_dim), jnp.float32),    # dec_mean | dec_std
    )

    # Single invocation, everything VMEM-resident (full-array blocks).
    # For large B, add grid=(B//TILE_B,) with BlockSpecs over the batch axis and
    # dimension_semantics=("parallel",) to engage v7x's second TensorCore.
    losses, z_em_es, dec_heads = pl.pallas_call(
        vae_kernel,
        out_shape=out_shape,
    )(x, eps,
      w_enc, params["b_enc"],
      w_eh, b_eh,
      w_dec, params["b_dec"],
      w_dh, b_dh)

    kld = losses[0, 0]
    nll = losses[0, 1]
    z = z_em_es[:, :z_dim]
    enc_mean = z_em_es[:, z_dim:2 * z_dim]
    enc_std = z_em_es[:, 2 * z_dim:]
    dec_mean = dec_heads[:, :x_dim]
    dec_std = dec_heads[:, x_dim:]
    return kld, nll, (enc_mean, enc_std), (dec_mean, dec_std), z


def make_params(key, x_dim, h_dim, z_dim):
    """Deterministic synthetic parameters (nn.Linear-style uniform init)."""
    keys = jax.random.split(key, 12)

    def lin(kw, kb, fan_in, fan_out):
        scale = 1.0 / np.sqrt(fan_in)
        w = jax.random.uniform(kw, (fan_in, fan_out), jnp.float32, -scale, scale)
        b = jax.random.uniform(kb, (1, fan_out), jnp.float32, -scale, scale)
        return w, b

    p = {}
    p["w_enc"], p["b_enc"] = lin(keys[0], keys[1], x_dim, h_dim)
    p["w_em"], p["b_em"] = lin(keys[2], keys[3], h_dim, z_dim)
    p["w_es"], p["b_es"] = lin(keys[4], keys[5], h_dim, z_dim)
    p["w_dec"], p["b_dec"] = lin(keys[6], keys[7], z_dim, h_dim)
    p["w_dm"], p["b_dm"] = lin(keys[8], keys[9], h_dim, x_dim)
    p["w_ds"], p["b_ds"] = lin(keys[10], keys[11], h_dim, x_dim)
    return p


def vae_forward_ref(x, eps, p):
    """Pure-JAX reference for correctness checking."""
    h = jnp.tanh(x @ p["w_enc"] + p["b_enc"])
    em = h @ p["w_em"] + p["b_em"]
    es = h @ p["w_es"] + p["b_es"]
    std = jnp.exp(0.5 * es)
    z = eps * std + em
    hd = jnp.tanh(z @ p["w_dec"] + p["b_dec"])
    dm = hd @ p["w_dm"] + p["b_dm"]
    ds = hd @ p["w_ds"] + p["b_ds"]
    kld = -0.5 * jnp.sum(1.0 + std - em**2 - jnp.exp(std))
    nll = jnp.sum(0.5 * np.log(2 * np.pi) + 0.5 * ds
                  + (x - dm) ** 2 / (2.0 * jnp.exp(ds)))
    return kld, nll, (em, es), (dm, ds), z


if __name__ == "__main__":
    # Small shapes consistent with the "200 D" VAE, scaled-down batch.
    B, X_DIM, H_DIM, Z_DIM = 8, 200, 32, 16

    key = jax.random.PRNGKey(0)
    k_x, k_eps, k_p = jax.random.split(key, 3)

    x = jax.random.normal(k_x, (B, X_DIM), dtype=jnp.float32)
    eps = jax.random.normal(k_eps, (B, Z_DIM), dtype=jnp.float32)
    params = make_params(k_p, X_DIM, H_DIM, Z_DIM)

    # ---- f32 path (exact semantics) ----
    out = jax.block_until_ready(vae_forward(x, eps, params))
    kld, nll, (em, es), (dm, ds), z = out

    rkld, rnll, (rem, res), (rdm, rds), rz = vae_forward_ref(x, eps, params)
    np.testing.assert_allclose(np.array(em), np.array(rem), rtol=2e-5, atol=2e-5)
    np.testing.assert_allclose(np.array(es), np.array(res), rtol=2e-5, atol=2e-5)
    np.testing.assert_allclose(np.array(dm), np.array(rdm), rtol=2e-5, atol=2e-5)
    np.testing.assert_allclose(np.array(ds), np.array(rds), rtol=2e-5, atol=2e-5)
    np.testing.assert_allclose(np.array(z), np.array(rz), rtol=2e-5, atol=2e-5)
    np.testing.assert_allclose(np.array(kld), np.array(rkld), rtol=5e-5, atol=1e-4)
    np.testing.assert_allclose(np.array(nll), np.array(rnll), rtol=5e-5, atol=1e-4)

    # ---- bf16-weight MXU path (v6e/v5e bandwidth optimization): run + sanity ----
    out_bf16 = jax.block_until_ready(
        vae_forward(x, eps, params, weights_dtype=jnp.bfloat16))
    for leaf in jax.tree_util.tree_leaves(out_bf16):
        assert np.all(np.isfinite(np.array(leaf)))

    print("KERNEL_OK")
</pallas_src>

<mosaic_0001>
module attributes {stable_mosaic.version = 11 : i64} {
  func.func @vae_kernel(%arg0: memref<8x200xf32, #tpu.memory_space<vmem>>, %arg1: memref<8x16xf32, #tpu.memory_space<vmem>>, %arg2: memref<200x32xf32, #tpu.memory_space<vmem>>, %arg3: memref<1x32xf32, #tpu.memory_space<vmem>>, %arg4: memref<32x32xf32, #tpu.memory_space<vmem>>, %arg5: memref<1x32xf32, #tpu.memory_space<vmem>>, %arg6: memref<16x32xf32, #tpu.memory_space<vmem>>, %arg7: memref<1x32xf32, #tpu.memory_space<vmem>>, %arg8: memref<32x400xf32, #tpu.memory_space<vmem>>, %arg9: memref<1x400xf32, #tpu.memory_space<vmem>>, %arg10: memref<1x128xf32, #tpu.memory_space<vmem>>, %arg11: memref<8x48xf32, #tpu.memory_space<vmem>>, %arg12: memref<8x400xf32, #tpu.memory_space<vmem>>) attributes {dimension_semantics = [], scalar_prefetch = 0 : i64, scratch_operands = 0 : i64, tpu.core_type = #tpu.core_type<tc>} {
    %c0 = arith.constant 0 : index
    %c0_0 = arith.constant 0 : index
    %0 = vector.load %arg0[%c0, %c0_0] : memref<8x200xf32, #tpu.memory_space<vmem>>, vector<8x200xf32>
    %c0_1 = arith.constant 0 : index
    %c0_2 = arith.constant 0 : index
    %1 = vector.load %arg1[%c0_1, %c0_2] : memref<8x16xf32, #tpu.memory_space<vmem>>, vector<8x16xf32>
    %c0_3 = arith.constant 0 : index
    %c0_4 = arith.constant 0 : index
    %2 = vector.load %arg2[%c0_3, %c0_4] : memref<200x32xf32, #tpu.memory_space<vmem>>, vector<200x32xf32>
    %cst = arith.constant dense<0.000000e+00> : vector<8x32xf32>
    %3 = tpu.matmul %0, %2, %cst {dimension_numbers = #tpu.dot_dimension_numbers<[1], [0], [0], [1], [0, 0, 1, 1], [], []>} : vector<8x200xf32>, vector<200x32xf32>, vector<8x32xf32> -> vector<8x32xf32>
    %c0_5 = arith.constant 0 : index
    %c0_6 = arith.constant 0 : index
    %4 = vector.load %arg3[%c0_5, %c0_6] : memref<1x32xf32, #tpu.memory_space<vmem>>, vector<1x32xf32>
    %5 = vector.broadcast %4 : vector<1x32xf32> to vector<8x32xf32>
    %6 = arith.addf %3, %5 : vector<8x32xf32>
    %7 = math.tanh %6 : vector<8x32xf32>
    %c0_7 = arith.constant 0 : index
    %c0_8 = arith.constant 0 : index
    %8 = vector.load %arg4[%c0_7, %c0_8] : memref<32x32xf32, #tpu.memory_space<vmem>>, vector<32x32xf32>
    %cst_9 = arith.constant dense<0.000000e+00> : vector<8x32xf32>
    %9 = tpu.matmul %7, %8, %cst_9 {dimension_numbers = #tpu.dot_dimension_numbers<[1], [0], [0], [1], [0, 0, 1, 1], [], []>} : vector<8x32xf32>, vector<32x32xf32>, vector<8x32xf32> -> vector<8x32xf32>
    %c0_10 = arith.constant 0 : index
    %c0_11 = arith.constant 0 : index
    %10 = vector.load %arg5[%c0_10, %c0_11] : memref<1x32xf32, #tpu.memory_space<vmem>>, vector<1x32xf32>
    %11 = vector.broadcast %10 : vector<1x32xf32> to vector<8x32xf32>
    %12 = arith.addf %9, %11 : vector<8x32xf32>
    %13 = vector.extract_strided_slice %12 {offsets = [0, 0], sizes = [8, 16], strides = [1, 1]} : vector<8x32xf32> to vector<8x16xf32>
    %14 = vector.extract_strided_slice %12 {offsets = [0, 16], sizes = [8, 16], strides = [1, 1]} : vector<8x32xf32> to vector<8x16xf32>
    %cst_12 = arith.constant 5.000000e-01 : f32
    %15 = vector.broadcast %cst_12 : f32 to vector<8x16xf32>
    %16 = arith.mulf %15, %14 : vector<8x16xf32>
    %17 = math.exp %16 : vector<8x16xf32>
    %18 = arith.mulf %1, %17 : vector<8x16xf32>
    %19 = arith.addf %18, %13 : vector<8x16xf32>
    %c0_13 = arith.constant 0 : index
    %c0_14 = arith.constant 0 : index
    %20 = vector.load %arg6[%c0_13, %c0_14] : memref<16x32xf32, #tpu.memory_space<vmem>>, vector<16x32xf32>
    %cst_15 = arith.constant dense<0.000000e+00> : vector<8x32xf32>
    %21 = tpu.matmul %19, %20, %cst_15 {dimension_numbers = #tpu.dot_dimension_numbers<[1], [0], [0], [1], [0, 0, 1, 1], [], []>} : vector<8x16xf32>, vector<16x32xf32>, vector<8x32xf32> -> vector<8x32xf32>
    %c0_16 = arith.constant 0 : index
    %c0_17 = arith.constant 0 : index
    %22 = vector.load %arg7[%c0_16, %c0_17] : memref<1x32xf32, #tpu.memory_space<vmem>>, vector<1x32xf32>
    %23 = vector.broadcast %22 : vector<1x32xf32> to vector<8x32xf32>
    %24 = arith.addf %21, %23 : vector<8x32xf32>
    %25 = math.tanh %24 : vector<8x32xf32>
    %c0_18 = arith.constant 0 : index
    %c0_19 = arith.constant 0 : index
    %26 = vector.load %arg8[%c0_18, %c0_19] : memref<32x400xf32, #tpu.memory_space<vmem>>, vector<32x400xf32>
    %cst_20 = arith.constant dense<0.000000e+00> : vector<8x400xf32>
    %27 = tpu.matmul %25, %26, %cst_20 {dimension_numbers = #tpu.dot_dimension_numbers<[1], [0], [0], [1], [0, 0, 1, 1], [], []>} : vector<8x32xf32>, vector<32x400xf32>, vector<8x400xf32> -> vector<8x400xf32>
    %c0_21 = arith.constant 0 : index
    %c0_22 = arith.constant 0 : index
    %28 = vector.load %arg9[%c0_21, %c0_22] : memref<1x400xf32, #tpu.memory_space<vmem>>, vector<1x400xf32>
    %29 = vector.broadcast %28 : vector<1x400xf32> to vector<8x400xf32>
    %30 = arith.addf %27, %29 : vector<8x400xf32>
    %31 = vector.extract_strided_slice %30 {offsets = [0, 0], sizes = [8, 200], strides = [1, 1]} : vector<8x400xf32> to vector<8x200xf32>
    %32 = vector.extract_strided_slice %30 {offsets = [0, 200], sizes = [8, 200], strides = [1, 1]} : vector<8x400xf32> to vector<8x200xf32>
    %cst_23 = arith.constant 1.000000e+00 : f32
    %33 = vector.broadcast %cst_23 : f32 to vector<8x16xf32>
    %34 = arith.addf %33, %17 : vector<8x16xf32>
    %35 = arith.mulf %13, %13 : vector<8x16xf32>
    %36 = arith.subf %34, %35 : vector<8x16xf32>
    %37 = math.exp %17 : vector<8x16xf32>
    %38 = arith.subf %36, %37 : vector<8x16xf32>
    %39 = vector.shape_cast %38 : vector<8x16xf32> to vector<1x8x16xf32>
    %cst_24 = arith.constant dense<0.000000e+00> : vector<1xf32>
    %40 = vector.multi_reduction <add>, %39, %cst_24 [1, 2] : vector<1x8x16xf32> to vector<1xf32>
    %41 = vector.shape_cast %40 : vector<1xf32> to vector<1x1x1xf32>
    %42 = vector.extract %41[0, 0, 0] : f32 from vector<1x1x1xf32>
    %cst_25 = arith.constant -5.000000e-01 : f32
    %43 = arith.mulf %cst_25, %42 : f32
    %cst_26 = arith.constant 5.000000e-01 : f32
    %44 = vector.broadcast %cst_26 : f32 to vector<8x200xf32>
    %45 = arith.mulf %44, %32 : vector<8x200xf32>
    %cst_27 = arith.constant 0.918938517 : f32
    %46 = vector.broadcast %cst_27 : f32 to vector<8x200xf32>
    %47 = arith.addf %46, %45 : vector<8x200xf32>
    %48 = arith.subf %0, %31 : vector<8x200xf32>
    %49 = arith.mulf %48, %48 : vector<8x200xf32>
    %cst_28 = arith.constant 0.000000e+00 : f32
    %50 = vector.broadcast %cst_28 : f32 to vector<8x200xf32>
    %51 = arith.subf %50, %32 : vector<8x200xf32>
    %52 = math.exp %51 : vector<8x200xf32>
    %cst_29 = arith.constant 5.000000e-01 : f32
    %53 = vector.broadcast %cst_29 : f32 to vector<8x200xf32>
    %54 = arith.mulf %53, %52 : vector<8x200xf32>
    %55 = arith.mulf %49, %54 : vector<8x200xf32>
    %56 = arith.addf %47, %55 : vector<8x200xf32>
    %57 = vector.shape_cast %56 : vector<8x200xf32> to vector<1x8x200xf32>
    %cst_30 = arith.constant dense<0.000000e+00> : vector<1xf32>
    %58 = vector.multi_reduction <add>, %57, %cst_30 [1, 2] : vector<1x8x200xf32> to vector<1xf32>
    %59 = vector.shape_cast %58 : vector<1xf32> to vector<1x1x1xf32>
    %60 = vector.extract %59[0, 0, 0] : f32 from vector<1x1x1xf32>
    %61 = tpu.iota {dimensions = array<i32: 1>} : vector<1x128xi32>
    %c0_i32 = arith.constant 0 : i32
    %62 = vector.broadcast %c0_i32 : i32 to vector<1x128xi32>
    %63 = arith.cmpi eq, %61, %62 : vector<1x128xi32>
    %c1_i32 = arith.constant 1 : i32
    %64 = vector.broadcast %c1_i32 : i32 to vector<1x128xi32>
    %65 = arith.cmpi eq, %61, %64 : vector<1x128xi32>
    %cst_31 = arith.constant 0.000000e+00 : f32
    %66 = vector.broadcast %60 : f32 to vector<1x128xf32>
    %67 = vector.broadcast %cst_31 : f32 to vector<1x128xf32>
    %68 = arith.select %65, %66, %67 : vector<1x128xi1>, vector<1x128xf32>
    %69 = vector.broadcast %43 : f32 to vector<1x128xf32>
    %70 = arith.select %63, %69, %68 : vector<1x128xi1>, vector<1x128xf32>
    %c0_32 = arith.constant 0 : index
    %c0_33 = arith.constant 0 : index
    %71 = vector.load %arg10[%c0_32, %c0_33] : memref<1x128xf32, #tpu.memory_space<vmem>>, vector<1x128xf32>
    tpu.vector_store %arg10[%c0_32, %c0_33], %70 {strides = array<i32>} : memref<1x128xf32, #tpu.memory_space<vmem>>, vector<1x128xf32>,
    %72 = tpu.concatenate %19, %12 in 1 : vector<8x16xf32>, vector<8x32xf32> -> vector<8x48xf32>
    %c0_34 = arith.constant 0 : index
    %c0_35 = arith.constant 0 : index
    %73 = vector.load %arg11[%c0_34, %c0_35] : memref<8x48xf32, #tpu.memory_space<vmem>>, vector<8x48xf32>
    tpu.vector_store %arg11[%c0_34, %c0_35], %72 {strides = array<i32>} : memref<8x48xf32, #tpu.memory_space<vmem>>, vector<8x48xf32>,
    %c0_36 = arith.constant 0 : index
    %c0_37 = arith.constant 0 : index
    %74 = vector.load %arg12[%c0_36, %c0_37] : memref<8x400xf32, #tpu.memory_space<vmem>>, vector<8x400xf32>
    tpu.vector_store %arg12[%c0_36, %c0_37], %30 {strides = array<i32>} : memref<8x400xf32, #tpu.memory_space<vmem>>, vector<8x400xf32>,
    return
  }
}

</mosaic_0001>

<llo_original>
// kernel: tpu_custom_call.1
$region0: #{tpu_custom_call.1}
  #allocation0 [shape = 'u32[]', space=smem, size = 0x4, offset = 0x4, fixed_abs, tag = 'smem constant byte address 0x4 - core index']
  #allocation1 [shape = 'u32[144,128]{1,0:T(1,128)}', space=vmem, size = 0x12000, scoped, tag = 'internal scratch']
  %s0 = inlined_call_operand.vmem [shape: f32[8,200], index: 0, kind: input, shape index: {}]
  %s1 = inlined_call_operand.vmem [shape: f32[8,16], index: 1, kind: input, shape index: {}]
  %s2 = inlined_call_operand.vmem [shape: f32[200,32], index: 2, kind: input, shape index: {}]
  %s3 = inlined_call_operand.vmem [shape: f32[1,32], index: 3, kind: input, shape index: {}]
  %s4 = inlined_call_operand.vmem [shape: f32[32,32], index: 4, kind: input, shape index: {}]
  %s5 = inlined_call_operand.vmem [shape: f32[1,32], index: 5, kind: input, shape index: {}]
  %s6 = inlined_call_operand.vmem [shape: f32[16,32], index: 6, kind: input, shape index: {}]
  %s7 = inlined_call_operand.vmem [shape: f32[1,32], index: 7, kind: input, shape index: {}]
  %s8 = inlined_call_operand.vmem [shape: f32[32,400], index: 8, kind: input, shape index: {}]
  %s9 = inlined_call_operand.vmem [shape: f32[1,400], index: 9, kind: input, shape index: {}]
  %s10 = inlined_call_operand.hbm [shape: f32[1,128], index: 10, kind: output, shape index: {0}]
  %s11 = inlined_call_operand.hbm [shape: f32[8,48], index: 11, kind: output, shape index: {1}]
  %s12 = inlined_call_operand.hbm [shape: f32[8,400], index: 12, kind: output, shape index: {2}]
  %13 = xla_tuple %s10, %s11, %s12
  %s14 = sld [smem:[#allocation0]]
  $region66: #{tpu_custom_call.1} parent=0
    _
  %s16 = ssub.s32 1, %s14
  %s17 = scalar_select 0, %s16, %s14
  $region1: #{tpu_custom_call.1} parent=0
    #allocation2 [shape = 'u8[512]{0}', space=vmem, size = 0x400, scoped, tag = 'output window, operand 0, single buffered']
    #allocation3 [shape = 's32[1]{0}', space=sflag, size = 0x4, scoped, tag = 'scoped memory for tpu_custom_call.1']
    #allocation4 [shape = 'u8[4096]{0}', space=vmem, size = 0x1000, scoped, tag = 'output window, operand 1, single buffered']
    #allocation5 [shape = 's32[1]{0}', space=sflag, size = 0x4, scoped, tag = 'scoped memory for tpu_custom_call.1']
    #allocation6 [shape = 'u8[16384]{0}', space=vmem, size = 0x4000, scoped, tag = 'output window, operand 2, single buffered']
    %18 = vsyncpa [#allocation3], 0
    %19 = vsyncpa [#allocation5], 0
    // Predicated region
    $region2: #{tpu_custom_call.1} parent=1 // pred_check
      _
    $region3: #{tpu_custom_call.1} parent=1 // pred_check_branch
      %21 = sbr.rel (0) target = $region5
    $region4: #{tpu_custom_call.1} parent=1 // pred_region
      _
    $region5: #{tpu_custom_call.1} parent=1 // pred_fallthru
      _
    // Predicated region
    $region6: #{tpu_custom_call.1} parent=1 // pred_check
      _
    $region7: #{tpu_custom_call.1} parent=1 // pred_check_branch
      %23 = sbr.rel (0) target = $region9
    $region8: #{tpu_custom_call.1} parent=1 // pred_region
      _
    $region9: #{tpu_custom_call.1} parent=1 // pred_fallthru
      _
    // Predicated region
    $region10: #{tpu_custom_call.1} parent=1 // pred_check
      _
    $region11: #{tpu_custom_call.1} parent=1 // pred_check_branch
      %25 = sbr.rel (0) target = $region13
    $region12: #{tpu_custom_call.1} parent=1 // pred_region
      _
    $region13: #{tpu_custom_call.1} parent=1 // pred_fallthru
      _
    // Predicated region
    $region14: #{tpu_custom_call.1} parent=1 // pred_check
      _
    $region15: #{tpu_custom_call.1} parent=1 // pred_check_branch
      %27 = sbr.rel (0) target = $region17
    $region16: #{tpu_custom_call.1} parent=1 // pred_region
      _
    $region17: #{tpu_custom_call.1} parent=1 // pred_fallthru
      _
    // Predicated region
    $region18: #{tpu_custom_call.1} parent=1 // pred_check
      _
    $region19: #{tpu_custom_call.1} parent=1 // pred_check_branch
      %29 = sbr.rel (0) target = $region21
    $region20: #{tpu_custom_call.1} parent=1 // pred_region
      _
    $region21: #{tpu_custom_call.1} parent=1 // pred_fallthru
      _
    // Predicated region
    $region22: #{tpu_custom_call.1} parent=1 // pred_check
      _
    $region23: #{tpu_custom_call.1} parent=1 // pred_check_branch
      %31 = sbr.rel (0) target = $region25
    $region24: #{tpu_custom_call.1} parent=1 // pred_region
      _
    $region25: #{tpu_custom_call.1} parent=1 // pred_fallthru
      _
    // Predicated region
    $region26: #{tpu_custom_call.1} parent=1 // pred_check
      _
    $region27: #{tpu_custom_call.1} parent=1 // pred_check_branch
      %33 = sbr.rel (0) target = $region29
    $region28: #{tpu_custom_call.1} parent=1 // pred_region
      _
    $region29: #{tpu_custom_call.1} parent=1 // pred_fallthru
      _
    // Predicated region
    $region30: #{tpu_custom_call.1} parent=1 // pred_check
      _
    $region31: #{tpu_custom_call.1} parent=1 // pred_check_branch
      %35 = sbr.rel (0) target = $region33
    $region32: #{tpu_custom_call.1} parent=1 // pred_region
      _
    $region33: #{tpu_custom_call.1} parent=1 // pred_fallthru
      _
    // Predicated region
    $region34: #{tpu_custom_call.1} parent=1 // pred_check
      _
    $region35: #{tpu_custom_call.1} parent=1 // pred_check_branch
      %37 = sbr.rel (0) target = $region37
    $region36: #{tpu_custom_call.1} parent=1 // pred_region
      _
    $region37: #{tpu_custom_call.1} parent=1 // pred_fallthru
      _
    // Predicated region
    $region38: #{tpu_custom_call.1} parent=1 // pred_check
      _
    $region39: #{tpu_custom_call.1} parent=1 // pred_check_branch
      %39 = sbr.rel (0) target = $region41
    $region40: #{tpu_custom_call.1} parent=1 // pred_region
      _
    $region41: #{tpu_custom_call.1} parent=1 // pred_fallthru
      _
    %v40 = vld [vmem:[%s0] sm:$0xff]
    %v41 = vld [vmem:[%s0 + $0x8] sm:$0xff]
    %v42 = vld [vmem:[%s1] sm:$0xff]
    %v43 = vld [vmem:[%s2] sm:$0xff]
    %v44 = vld [vmem:[%s2 + $0x8] sm:$0xff]
    %v45 = vld [vmem:[%s2 + $0x10] sm:$0xff]
    %v46 = vld [vmem:[%s2 + $0x18] sm:$0xff]
    %v47 = vld [vmem:[%s2 + $0x20] sm:$0xff]
    %v48 = vld [vmem:[%s2 + $0x28] sm:$0xff]
    %v49 = vld [vmem:[%s2 + $0x30] sm:$0xff]
    %v50 = vld [vmem:[%s2 + $0x38] sm:$0xff]
    %v51 = vld [vmem:[%s2 + $0x40] sm:$0xff]
    %v52 = vld [vmem:[%s2 + $0x48] sm:$0xff]
    %v53 = vld [vmem:[%s2 + $0x50] sm:$0xff]
    %v54 = vld [vmem:[%s2 + $0x58] sm:$0xff]
    %v55 = vld [vmem:[%s2 + $0x60] sm:$0xff]
    %v56 = vld [vmem:[%s2 + $0x68] sm:$0xff]
    %v57 = vld [vmem:[%s2 + $0x70] sm:$0xff]
    %v58 = vld [vmem:[%s2 + $0x78] sm:$0xff]
    %v59 = vld [vmem:[%s2 + $0x80] sm:$0xff]
    %v60 = vld [vmem:[%s2 + $0x88] sm:$0xff]
    %v61 = vld [vmem:[%s2 + $0x90] sm:$0xff]
    %v62 = vld [vmem:[%s2 + $0x98] sm:$0xff]
    %v63 = vld [vmem:[%s2 + $0xa0] sm:$0xff]
    %v64 = vld [vmem:[%s2 + $0xa8] sm:$0xff]
    %v65 = vld [vmem:[%s2 + $0xb0] sm:$0xff]
    %v66 = vld [vmem:[%s2 + $0xb8] sm:$0xff]
    %v67 = vld [vmem:[%s2 + $0xc0] sm:$0xff]
    %v68 = vld [vmem:[%s3] sm:$0x1]
    %v70 = vlaneseq
    %v71 = vshrl.u32 %v70, 7
    %v72 = vsub.s32 0, %v71
    %v73 = vrot.slane %v68, %v72
    %vm75 = vcmask 588800
    %v77 = vsel %vm75, %v41, 0
    %79 = vmatprep.subr.mxu0 0.0
    %80 = vmatpush1.msra.mxu0 %v43
    %81 = vmatprep.subr.mxu0 0.0
    %82 = vmatpush1.msra.mxu0 %v44
    %83 = vmatprep.subr.mxu0 0.0
    %84 = vmatpush1.msra.mxu0 %v45
    %85 = vmatprep.subr.mxu0 0.0
    %86 = vmatpush1.msra.mxu0 %v46
    %87 = vmatprep.subr.mxu0 0.0
    %88 = vmatpush1.msra.mxu0 %v47
    %89 = vmatprep.subr.mxu0 0.0
    %90 = vmatpush1.msra.mxu0 %v48
    %91 = vmatprep.subr.mxu0 0.0
    %92 = vmatpush1.msra.mxu0 %v49
    %93 = vmatprep.subr.mxu0 0.0
    %94 = vmatpush1.msra.mxu0 %v50
    %95 = vmatprep.subr.mxu0 0.0
    %96 = vmatpush1.msra.mxu0 %v51
    %97 = vmatprep.subr.mxu0 0.0
    %98 = vmatpush1.msra.mxu0 %v52
    %99 = vmatprep.subr.mxu0 0.0
    %100 = vmatpush1.msra.mxu0 %v53
    %101 = vmatprep.subr.mxu0 0.0
    %102 = vmatpush1.msra.mxu0 %v54
    %103 = vmatprep.subr.mxu0 0.0
    %104 = vmatpush1.msra.mxu0 %v55
    %105 = vmatprep.subr.mxu0 0.0
    %106 = vmatpush1.msra.mxu0 %v56
    %107 = vmatprep.subr.mxu0 0.0
    %108 = vmatpush1.msra.mxu0 %v57
    %109 = vmatprep.subr.mxu0 0.0
    %110 = vmatpush1.msra.mxu0 %v58
    %111 = vmatprep.subr.mxu0 0.0
    %112 = vmatpush1.msra.mxu0 %v59
    %113 = vmatprep.subr.mxu0 0.0
    %114 = vmatpush1.msra.mxu0 %v60
    %115 = vmatprep.subr.mxu0 0.0
    %116 = vmatpush1.msra.mxu0 %v61
    %117 = vmatprep.subr.mxu0 0.0
    %118 = vmatpush1.msra.mxu0 %v62
    %119 = vmatprep.subr.mxu0 0.0
    %120 = vmatpush1.msra.mxu0 %v63
    %121 = vmatprep.subr.mxu0 0.0
    %122 = vmatpush1.msra.mxu0 %v64
    %123 = vmatprep.subr.mxu0 0.0
    %124 = vmatpush1.msra.mxu0 %v65
    %125 = vmatprep.subr.mxu0 0.0
    %126 = vmatpush1.msra.mxu0 %v66
    %127 = vmatprep.subr.mxu0 0.0
    %128 = vmatpush1.msra.mxu0 %v67
    %129 = vmatprep.subr.mxu0 0.0
    %130 = vmatpush1.msra.mxu0 0.0
    %131 = vmatprep.subr.mxu0 0.0
    %132 = vmatpush1.msra.mxu0 0.0
    %133 = vmatprep.subr.mxu0 0.0
    %134 = vmatpush1.msra.mxu0 0.0
    %135 = vmatprep.subr.mxu0 0.0
    %136 = vmatpush1.msra.mxu0 0.0
    %137 = vmatprep.subr.mxu0 0.0
    %138 = vmatpush1.msra.mxu0 0.0
    %139 = vmatprep.subr.mxu0 0.0
    %140 = vmatpush1.msra.mxu0 0.0
    %141 = vmatprep.subr.mxu0 0.0
    %142 = vmatpush1.msra.mxu0 0.0
    %143 = vmatprep.mubr.f32.mxu0 %v77
    %144 = vmatmul.mubr.f32.gmra.mrb[0].mxu0 %v40
    %v145 = vpop.f32.mrb[0].mxu0
    %v146 = vadd.f32 %v73, %v145
    %v147 = vpop.f32.mrb[0].mxu0
    %148 = vdwg.mxu0
    %v149 = vtanh.pop %v146
    %v150 = vld [vmem:[%s4] sm:$0xff]
    %v151 = vld [vmem:[%s4 + $0x8] sm:$0xff]
    %v152 = vld [vmem:[%s4 + $0x10] sm:$0xff]
    %v153 = vld [vmem:[%s4 + $0x18] sm:$0xff]
    %v154 = vld [vmem:[%s5] sm:$0x1]
    %v156 = vlaneseq
    %v157 = vshrl.u32 %v156, 7
    %v158 = vsub.s32 0, %v157
    %v159 = vrot.slane %v154, %v158
    %vm161 = vcmask 261120
    %v163 = vsel %vm161, %v149, 0
    %165 = vmatprep.subr.mxu0 0.0
    %166 = vmatpush1.msra.mxu0 %v150
    %167 = vmatprep.subr.mxu0 0.0
    %168 = vmatpush1.msra.mxu0 %v151
    %169 = vmatprep.subr.mxu0 0.0
    %170 = vmatpush1.msra.mxu0 %v152
    %171 = vmatprep.subr.mxu0 0.0
    %172 = vmatpush1.msra.mxu0 %v153
    %173 = vmatprep.subr.mxu0 0.0
    %174 = vmatpush1.msra.mxu0 0.0
    %175 = vmatprep.subr.mxu0 0.0
    %176 = vmatpush1.msra.mxu0 0.0
    %177 = vmatprep.subr.mxu0 0.0
    %178 = vmatpush1.msra.mxu0 0.0
    %179 = vmatprep.subr.mxu0 0.0
    %180 = vmatpush1.msra.mxu0 0.0
    %181 = vmatprep.subr.mxu0 0.0
    %182 = vmatpush1.msra.mxu0 0.0
    %183 = vmatprep.subr.mxu0 0.0
    %184 = vmatpush1.msra.mxu0 0.0
    %185 = vmatprep.subr.mxu0 0.0
    %186 = vmatpush1.msra.mxu0 0.0
    %187 = vmatprep.subr.mxu0 0.0
    %188 = vmatpush1.msra.mxu0 0.0
    %189 = vmatprep.subr.mxu0 0.0
    %190 = vmatpush1.msra.mxu0 0.0
    %191 = vmatprep.subr.mxu0 0.0
    %192 = vmatpush1.msra.mxu0 0.0
    %193 = vmatprep.subr.mxu0 0.0
    %194 = vmatpush1.msra.mxu0 0.0
    %195 = vmatprep.subr.mxu0 0.0
    %196 = vmatpush1.msra.mxu0 0.0
    %197 = vmatprep.subr.mxu0 0.0
    %198 = vmatpush1.msra.mxu0 0.0
    %199 = vmatprep.subr.mxu0 0.0
    %200 = vmatpush1.msra.mxu0 0.0
    %201 = vmatprep.subr.mxu0 0.0
    %202 = vmatpush1.msra.mxu0 0.0
    %203 = vmatprep.subr.mxu0 0.0
    %204 = vmatpush1.msra.mxu0 0.0
    %205 = vmatprep.subr.mxu0 0.0
    %206 = vmatpush1.msra.mxu0 0.0
    %207 = vmatprep.subr.mxu0 0.0
    %208 = vmatpush1.msra.mxu0 0.0
    %209 = vmatprep.subr.mxu0 0.0
    %210 = vmatpush1.msra.mxu0 0.0
    %211 = vmatprep.subr.mxu0 0.0
    %212 = vmatpush1.msra.mxu0 0.0
    %213 = vmatprep.subr.mxu0 0.0
    %214 = vmatpush1.msra.mxu0 0.0
    %215 = vmatprep.subr.mxu0 0.0
    %216 = vmatpush1.msra.mxu0 0.0
    %217 = vmatprep.subr.mxu0 0.0
    %218 = vmatpush1.msra.mxu0 0.0
    %219 = vmatprep.subr.mxu0 0.0
    %220 = vmatpush1.msra.mxu0 0.0
    %221 = vmatprep.subr.mxu0 0.0
    %222 = vmatpush1.msra.mxu0 0.0
    %223 = vmatprep.subr.mxu0 0.0
    %224 = vmatpush1.msra.mxu0 0.0
    %225 = vmatprep.subr.mxu0 0.0
    %226 = vmatpush1.msra.mxu0 0.0
    %227 = vmatprep.subr.mxu0 0.0
    %228 = vmatpush1.msra.mxu0 0.0
    %229 = vmatprep.mubr.f32.mxu0 0.0
    %230 = vmatmul.mubr.f32.gmra.mrb[0].mxu0 %v163
    %v231 = vpop.f32.mrb[0].mxu0
    %v232 = vadd.f32 %v159, %v231
    %v233 = vpop.f32.mrb[0].mxu0
    %234 = vdwg.mxu0
    %v235 = vmul.f32 %v232, 0.5
    %v236 = vmul.f32 %v235, 1.442695
    %v237 = vpow.pop %v236
    %239 = vrot.lane.b32.xlu0 %v237, 112
    %v240 = vpop.permute.xlu0 %239
    %v242 = vmul.f32 %v42, %v240
    %v243 = vadd.f32 %v242, %v232
    %v244 = vld [vmem:[%s6] sm:$0xff]
    %v245 = vld [vmem:[%s6 + $0x8] sm:$0xff]
    %v246 = vld [vmem:[%s7] sm:$0x1]
    %v248 = vlaneseq
    %v249 = vshrl.u32 %v248, 7
    %v250 = vsub.s32 0, %v249
    %v251 = vrot.slane %v246, %v250
    %vm253 = vcmask 130048
    %v255 = vsel %vm253, %v243, 0
    %257 = vmatprep.subr.mxu0 0.0
    %258 = vmatpush1.msra.mxu0 %v244
    %259 = vmatprep.subr.mxu0 0.0
    %260 = vmatpush1.msra.mxu0 %v245
    %261 = vmatprep.subr.mxu0 0.0
    %262 = vmatpush1.msra.mxu0 0.0
    %263 = vmatprep.subr.mxu0 0.0
    %264 = vmatpush1.msra.mxu0 0.0
    %265 = vmatprep.subr.mxu0 0.0
    %266 = vmatpush1.msra.mxu0 0.0
    %267 = vmatprep.subr.mxu0 0.0
    %268 = vmatpush1.msra.mxu0 0.0
    %269 = vmatprep.subr.mxu0 0.0
    %270 = vmatpush1.msra.mxu0 0.0
    %271 = vmatprep.subr.mxu0 0.0
    %272 = vmatpush1.msra.mxu0 0.0
    %273 = vmatprep.subr.mxu0 0.0
    %274 = vmatpush1.msra.mxu0 0.0
    %275 = vmatprep.subr.mxu0 0.0
    %276 = vmatpush1.msra.mxu0 0.0
    %277 = vmatprep.subr.mxu0 0.0
    %278 = vmatpush1.msra.mxu0 0.0
    %279 = vmatprep.subr.mxu0 0.0
    %280 = vmatpush1.msra.mxu0 0.0
    %281 = vmatprep.subr.mxu0 0.0
    %282 = vmatpush1.msra.mxu0 0.0
    %283 = vmatprep.subr.mxu0 0.0
    %284 = vmatpush1.msra.mxu0 0.0
    %285 = vmatprep.subr.mxu0 0.0
    %286 = vmatpush1.msra.mxu0 0.0
    %287 = vmatprep.subr.mxu0 0.0
    %288 = vmatpush1.msra.mxu0 0.0
    %289 = vmatprep.subr.mxu0 0.0
    %290 = vmatpush1.msra.mxu0 0.0
    %291 = vmatprep.subr.mxu0 0.0
    %292 = vmatpush1.msra.mxu0 0.0
    %293 = vmatprep.subr.mxu0 0.0
    %294 = vmatpush1.msra.mxu0 0.0
    %295 = vmatprep.subr.mxu0 0.0
    %296 = vmatpush1.msra.mxu0 0.0
    %297 = vmatprep.subr.mxu0 0.0
    %298 = vmatpush1.msra.mxu0 0.0
    %299 = vmatprep.subr.mxu0 0.0
    %300 = vmatpush1.msra.mxu0 0.0
    %301 = vmatprep.subr.mxu0 0.0
    %302 = vmatpush1.msra.mxu0 0.0
    %303 = vmatprep.subr.mxu0 0.0
    %304 = vmatpush1.msra.mxu0 0.0
    %305 = vmatprep.subr.mxu0 0.0
    %306 = vmatpush1.msra.mxu0 0.0
    %307 = vmatprep.subr.mxu0 0.0
    %308 = vmatpush1.msra.mxu0 0.0
    %309 = vmatprep.subr.mxu0 0.0
    %310 = vmatpush1.msra.mxu0 0.0
    %311 = vmatprep.subr.mxu0 0.0
    %312 = vmatpush1.msra.mxu0 0.0
    %313 = vmatprep.subr.mxu0 0.0
    %314 = vmatpush1.msra.mxu0 0.0
    %315 = vmatprep.subr.mxu0 0.0
    %316 = vmatpush1.msra.mxu0 0.0
    %317 = vmatprep.subr.mxu0 0.0
    %318 = vmatpush1.msra.mxu0 0.0
    %319 = vmatprep.subr.mxu0 0.0
    %320 = vmatpush1.msra.mxu0 0.0
    %321 = vmatprep.mubr.f32.mxu0 0.0
    %322 = vmatmul.mubr.f32.gmra.mrb[0].mxu0 %v255
    %v323 = vpop.f32.mrb[0].mxu0
    %v324 = vadd.f32 %v251, %v323
    %v325 = vpop.f32.mrb[0].mxu0
    %326 = vdwg.mxu0
    %v327 = vtanh.pop %v324
    %v328 = vld [vmem:[%s8] sm:$0xff]
    %v329 = vld [vmem:[%s8 + $0x8] sm:$0xff]
    %v330 = vld [vmem:[%s8 + $0x10] sm:$0xff]
    %v331 = vld [vmem:[%s8 + $0x18] sm:$0xff]
    %v332 = vld [vmem:[%s8 + $0x20] sm:$0xff]
    %v333 = vld [vmem:[%s8 + $0x28] sm:$0xff]
    %v334 = vld [vmem:[%s8 + $0x30] sm:$0xff]
    %v335 = vld [vmem:[%s8 + $0x38] sm:$0xff]
    %v336 = vld [vmem:[%s8 + $0x40] sm:$0xff]
    %v337 = vld [vmem:[%s8 + $0x48] sm:$0xff]
    %v338 = vld [vmem:[%s8 + $0x50] sm:$0xff]
    %v339 = vld [vmem:[%s8 + $0x58] sm:$0xff]
    %v340 = vld [vmem:[%s8 + $0x60] sm:$0xff]
    %v341 = vld [vmem:[%s8 + $0x68] sm:$0xff]
    %v342 = vld [vmem:[%s8 + $0x70] sm:$0xff]
    %v343 = vld [vmem:[%s8 + $0x78] sm:$0xff]
    %v344 = vld [vmem:[%s9] sm:$0xf]
    %v346 = vlaneseq
    %v347 = vshrl.u32 %v346, 7
    %v348 = vsub.s32 0, %v347
    %v349 = vrot.slane %v344, %v348
    %v350 = vlaneseq
    %v351 = vshrl.u32 %v350, 7
    %v352 = vsub.s32 1, %v351
    %v353 = vrot.slane %v344, %v352
    %v354 = vlaneseq
    %v355 = vshrl.u32 %v354, 7
    %v356 = vsub.s32 2, %v355
    %v357 = vrot.slane %v344, %v356
    %v358 = vlaneseq
    %v359 = vshrl.u32 %v358, 7
    %v360 = vsub.s32 3, %v359
    %v361 = vrot.slane %v344, %v360
    %v367 = vsel %vm161, %v327, 0
    %369 = vmatprep.subr.mxu0 %v329
    %370 = vmatpush1.msra.mxu0 %v328
    %371 = vmatprep.subr.mxu0 %v333
    %372 = vmatpush1.msra.mxu0 %v332
    %373 = vmatprep.subr.mxu0 %v337
    %374 = vmatpush1.msra.mxu0 %v336
    %375 = vmatprep.subr.mxu0 %v341
    %376 = vmatpush1.msra.mxu0 %v340
    %377 = vmatprep.subr.mxu0 0.0
    %378 = vmatpush1.msra.mxu0 0.0
    %379 = vmatprep.subr.mxu0 0.0
    %380 = vmatpush1.msra.mxu0 0.0
    %381 = vmatprep.subr.mxu0 0.0
    %382 = vmatpush1.msra.mxu0 0.0
    %383 = vmatprep.subr.mxu0 0.0
    %384 = vmatpush1.msra.mxu0 0.0
    %385 = vmatprep.subr.mxu0 0.0
    %386 = vmatpush1.msra.mxu0 0.0
    %387 = vmatprep.subr.mxu0 0.0
    %388 = vmatpush1.msra.mxu0 0.0
    %389 = vmatprep.subr.mxu0 0.0
    %390 = vmatpush1.msra.mxu0 0.0
    %391 = vmatprep.subr.mxu0 0.0
    %392 = vmatpush1.msra.mxu0 0.0
    %393 = vmatprep.subr.mxu0 0.0
    %394 = vmatpush1.msra.mxu0 0.0
    %395 = vmatprep.subr.mxu0 0.0
    %396 = vmatpush1.msra.mxu0 0.0
    %397 = vmatprep.subr.mxu0 0.0
    %398 = vmatpush1.msra.mxu0 0.0
    %399 = vmatprep.subr.mxu0 0.0
    %400 = vmatpush1.msra.mxu0 0.0
    %401 = vmatprep.subr.mxu0 0.0
    %402 = vmatpush1.msra.mxu0 0.0
    %403 = vmatprep.subr.mxu0 0.0
    %404 = vmatpush1.msra.mxu0 0.0
    %405 = vmatprep.subr.mxu0 0.0
    %406 = vmatpush1.msra.mxu0 0.0
    %407 = vmatprep.subr.mxu0 0.0
    %408 = vmatpush1.msra.mxu0 0.0
    %409 = vmatprep.subr.mxu0 0.0
    %410 = vmatpush1.msra.mxu0 0.0
    %411 = vmatprep.subr.mxu0 0.0
    %412 = vmatpush1.msra.mxu0 0.0
    %413 = vmatprep.subr.mxu0 0.0
    %414 = vmatpush1.msra.mxu0 0.0
    %415 = vmatprep.subr.mxu0 0.0
    %416 = vmatpush1.msra.mxu0 0.0
    %417 = vmatprep.subr.mxu0 0.0
    %418 = vmatpush1.msra.mxu0 0.0
    %419 = vmatprep.subr.mxu0 0.0
    %420 = vmatpush1.msra.mxu0 0.0
    %421 = vmatprep.subr.mxu0 0.0
    %422 = vmatpush1.msra.mxu0 0.0
    %423 = vmatprep.subr.mxu0 0.0
    %424 = vmatpush1.msra.mxu0 0.0
    %425 = vmatprep.subr.mxu0 0.0
    %426 = vmatpush1.msra.mxu0 0.0
    %427 = vmatprep.subr.mxu0 0.0
    %428 = vmatpush1.msra.mxu0 0.0
    %429 = vmatprep.subr.mxu0 0.0
    %430 = vmatpush1.msra.mxu0 0.0
    %431 = vmatprep.subr.mxu0 0.0
    %432 = vmatpush1.msra.mxu0 0.0
    %433 = vmatprep.mubr.f32.mxu0 0.0
    %434 = vmatmul.mubr.f32.gmra.mrb[0].mxu0 %v367
    %v435 = vpop.f32.mrb[0].mxu0
    %v436 = vadd.f32 %v349, %v435
    %v437 = vpop.f32.mrb[0].mxu0
    %v438 = vadd.f32 %v353, %v437
    %439 = vdwg.mxu0
    %440 = vmatprep.subr.mxu0 %v331
    %441 = vmatpush1.msra.mxu0 %v330
    %442 = vmatprep.subr.mxu0 %v335
    %443 = vmatpush1.msra.mxu0 %v334
    %444 = vmatprep.subr.mxu0 %v339
    %445 = vmatpush1.msra.mxu0 %v338
    %446 = vmatprep.subr.mxu0 %v343
    %447 = vmatpush1.msra.mxu0 %v342
    %448 = vmatprep.subr.mxu0 0.0
    %449 = vmatpush1.msra.mxu0 0.0
    %450 = vmatprep.subr.mxu0 0.0
    %451 = vmatpush1.msra.mxu0 0.0
    %452 = vmatprep.subr.mxu0 0.0
    %453 = vmatpush1.msra.mxu0 0.0
    %454 = vmatprep.subr.mxu0 0.0
    %455 = vmatpush1.msra.mxu0 0.0
    %456 = vmatprep.subr.mxu0 0.0
    %457 = vmatpush1.msra.mxu0 0.0
    %458 = vmatprep.subr.mxu0 0.0
    %459 = vmatpush1.msra.mxu0 0.0
    %460 = vmatprep.subr.mxu0 0.0
    %461 = vmatpush1.msra.mxu0 0.0
    %462 = vmatprep.subr.mxu0 0.0
    %463 = vmatpush1.msra.mxu0 0.0
    %464 = vmatprep.subr.mxu0 0.0
    %465 = vmatpush1.msra.mxu0 0.0
    %466 = vmatprep.subr.mxu0 0.0
    %467 = vmatpush1.msra.mxu0 0.0
    %468 = vmatprep.subr.mxu0 0.0
    %469 = vmatpush1.msra.mxu0 0.0
    %470 = vmatprep.subr.mxu0 0.0
    %471 = vmatpush1.msra.mxu0 0.0
    %472 = vmatprep.subr.mxu0 0.0
    %473 = vmatpush1.msra.mxu0 0.0
    %474 = vmatprep.subr.mxu0 0.0
    %475 = vmatpush1.msra.mxu0 0.0
    %476 = vmatprep.subr.mxu0 0.0
    %477 = vmatpush1.msra.mxu0 0.0
    %478 = vmatprep.subr.mxu0 0.0
    %479 = vmatpush1.msra.mxu0 0.0
    %480 = vmatprep.subr.mxu0 0.0
    %481 = vmatpush1.msra.mxu0 0.0
    %482 = vmatprep.subr.mxu0 0.0
    %483 = vmatpush1.msra.mxu0 0.0
    %484 = vmatprep.subr.mxu0 0.0
    %485 = vmatpush1.msra.mxu0 0.0
    %486 = vmatprep.subr.mxu0 0.0
    %487 = vmatpush1.msra.mxu0 0.0
    %488 = vmatprep.subr.mxu0 0.0
    %489 = vmatpush1.msra.mxu0 0.0
    %490 = vmatprep.subr.mxu0 0.0
    %491 = vmatpush1.msra.mxu0 0.0
    %492 = vmatprep.subr.mxu0 0.0
    %493 = vmatpush1.msra.mxu0 0.0
    %494 = vmatprep.subr.mxu0 0.0
    %495 = vmatpush1.msra.mxu0 0.0
    %496 = vmatprep.subr.mxu0 0.0
    %497 = vmatpush1.msra.mxu0 0.0
    %498 = vmatprep.subr.mxu0 0.0
    %499 = vmatpush1.msra.mxu0 0.0
    %500 = vmatprep.subr.mxu0 0.0
    %501 = vmatpush1.msra.mxu0 0.0
    %502 = vmatprep.subr.mxu0 0.0
    %503 = vmatpush1.msra.mxu0 0.0
    %504 = vmatprep.mubr.f32.mxu0 0.0
    %505 = vmatmul.mubr.f32.gmra.mrb[0].mxu0 %v367
    %v506 = vpop.f32.mrb[0].mxu0
    %v507 = vadd.f32 %v357, %v506
    %v508 = vpop.f32.mrb[0].mxu0
    %v509 = vadd.f32 %v361, %v508
    %510 = vdwg.mxu0
    %v511 = vadd.f32 %v237, 1.0
    %v512 = vmul.f32 %v232, %v232
    %514 = vrot.lane.b32.xlu0 %v512, 16
    %v515 = vpop.permute.xlu0 %514
    %v517 = vsub.f32 %v511, %v515
    %v518 = vmul.f32 %v237, 1.442695
    %v519 = vpow.pop %v518
    %v520 = vsub.f32 %v517, %v519
    %522 = vrot.lane.b32.xlu0 %v520, 112
    %v523 = vpop.permute.xlu0 %522
    %v525 = vsel %vm253, %v523, 0.0
    %526 = vadd.xlane.f32.xlu0 %v525
    %v527 = vpop.xlane.xlu0 %526
    %v528 = vrot.slane %v527, 4
    %v529 = vadd.f32 %v527, %v528
    %v530 = vrot.slane %v529, 2
    %v531 = vadd.f32 %v529, %v530
    %v532 = vrot.slane %v531, 1
    %v533 = vadd.f32 %v531, %v532
    %s534 = vtos %v533
    %s535 = smul.f32 %s534, -0.5
    %v536 = vmul.f32 %v438, 0.5
    %v537 = vmul.f32 %v507, 0.5
    %v538 = vmul.f32 %v509, 0.5
    %v539 = vadd.f32 %v536, 0.9189385
    %v540 = vadd.f32 %v537, 0.9189385
    %v541 = vadd.f32 %v538, 0.9189385
    %v542 = vsub.f32 %v40, %v436
    %v543 = vsub.f32 %v41, %v438
    %v544 = vmul.f32 %v542, %v542
    %v545 = vmul.f32 %v543, %v543
    %v546 = vsub.f32 0.0, %v438
    %v547 = vsub.f32 0.0, %v507
    %v548 = vsub.f32 0.0, %v509
    %v549 = vmul.f32 %v546, 1.442695
    %v550 = vpow.pop %v549
    %v551 = vmul.f32 %v547, 1.442695
    %v552 = vpow.pop %v551
    %v553 = vmul.f32 %v548, 1.442695
    %v554 = vpow.pop %v553
    %v555 = vmul.f32 %v550, 0.5
    %v556 = vmul.f32 %v552, 0.5
    %v557 = vmul.f32 %v554, 0.5
    %561 = vrot.lane.b32.xlu0 %v555, 56
    %v562 = vpop.permute.xlu0 %561
    %563 = vrot.lane.b32.xlu0 %v556, 56
    %v564 = vpop.permute.xlu0 %563
    %565 = vrot.lane.b32.xlu0 %v557, 56
    %v566 = vpop.permute.xlu0 %565
    %vm567 = vcmask 457728
    %v568 = vsel %vm567, %v562, %v564
    %v569 = vsel %vm567, %v564, %v566
    %v572 = vmul.f32 %v544, %v568
    %v573 = vmul.f32 %v545, %v569
    %576 = vrot.lane.b32.xlu0 %v572, 72
    %v577 = vpop.permute.xlu0 %576
    %578 = vrot.lane.b32.xlu0 %v573, 72
    %v579 = vpop.permute.xlu0 %578
    %v580 = vsel %vm75, %v577, %v579
    %v584 = vadd.f32 %v539, %v577
    %v585 = vadd.f32 %v540, %v580
    %v586 = vadd.f32 %v541, %v579
    %590 = vrot.lane.b32.xlu0 %v584, 56
    %v591 = vpop.permute.xlu0 %590
    %592 = vrot.lane.b32.xlu0 %v585, 56
    %v593 = vpop.permute.xlu0 %592
    %594 = vrot.lane.b32.xlu0 %v586, 56
    %v595 = vpop.permute.xlu0 %594
    %v596 = vsel %vm567, %v591, %v593
    %v597 = vsel %vm567, %v593, %v595
    %v600 = vsel %vm75, %v597, 0.0
    %v601 = vadd.f32 %v596, %v600
    %602 = vadd.xlane.f32.xlu0 %v601
    %v603 = vpop.xlane.xlu0 %602
    %v604 = vrot.slane %v603, 4
    %v605 = vadd.f32 %v603, %v604
    %v606 = vrot.slane %v605, 2
    %v607 = vadd.f32 %v605, %v606
    %v608 = vrot.slane %v607, 1
    %v609 = vadd.f32 %v607, %v608
    %s610 = vtos %v609
    %v611 = vlaneseq
    %v612 = vand.u32 %v611, 127
    %vm613 = vcmp.eq.s32.totalorder %v612, 0
    %vm614 = vcmp.eq.s32.totalorder %v612, 1
    %v615 = vstv %s610
    %v616 = vsel %vm614, %v615, 0.0
    %v617 = vstv %s535
    %v618 = vsel %vm613, %v617, %v616
    %619 = vst [vmem:[#allocation2] sm:$0x1] %v618
    %621 = vrot.lane.b32.xlu0 %v232, 16
    %v622 = vpop.permute.xlu0 %621
    %v624 = vsel %vm253, %v243, %v622
    %vm625 = vcmask 392192
    %626 = vst.msk [vmem:[#allocation4] sm:$0xff] %vm625, %v624
    %627 = vst [vmem:[#allocation6] sm:$0xff] %v436
    %628 = vst [vmem:[#allocation6 + $0x8] sm:$0xff] %v438
    %629 = vst [vmem:[#allocation6 + $0x10] sm:$0xff] %v507
    %630 = vst.msk [vmem:[#allocation6 + $0x18] sm:$0xff] %vm253, %v509
    // Predicated region
    $region42: #{tpu_custom_call.1} parent=1 // pred_check
      _
    $region43: #{tpu_custom_call.1} parent=1 // pred_check_branch
      %632 = sbr.rel (0) target = $region45
    $region44: #{tpu_custom_call.1} parent=1 // pred_region
      %s634 = ssub.s32 16, 16
      %635 = vsyncadd [#allocation3], %s634
      %s637 = sshll.u32 [#allocation2], 4
      %s638 = int_to_ptr.vmem [resolvable:$true] %s637
      %640 = dma.vmem_to_hbm [thread:$0]  %s638, 16, %s10, [#allocation3]
    $region45: #{tpu_custom_call.1} parent=1 // pred_fallthru
      _
    // Predicated region
    $region46: #{tpu_custom_call.1} parent=1 // pred_check
      _
    $region47: #{tpu_custom_call.1} parent=1 // pred_check_branch
      %642 = sbr.rel (0) target = $region49
    $region48: #{tpu_custom_call.1} parent=1 // pred_region
      %s644 = ssub.s32 128, 128
      %645 = vsyncadd [#allocation5], %s644
      %s647 = sshll.u32 [#allocation4], 4
      %s648 = int_to_ptr.vmem [resolvable:$true] %s647
      %650 = dma.vmem_to_hbm [thread:$0]  %s648, 128, %s11, [#allocation5]
    $region49: #{tpu_custom_call.1} parent=1 // pred_fallthru
      _
    // Predicated region
    $region50: #{tpu_custom_call.1} parent=1 // pred_check
      _
    $region51: #{tpu_custom_call.1} parent=1 // pred_check_branch
      %652 = sbr.rel (0) target = $region53
    $region52: #{tpu_custom_call.1} parent=1 // pred_region
      %s654 = ssub.s32 512, 512
      %655 = vsyncadd [#allocation5], %s654
      %s657 = sshll.u32 [#allocation6], 4
      %s658 = int_to_ptr.vmem [resolvable:$true] %s657
      %660 = dma.vmem_to_hbm [thread:$0]  %s658, 512, %s12, [#allocation5]
    $region53: #{tpu_custom_call.1} parent=1 // pred_fallthru
      _
    // Predicated region
    $region54: #{tpu_custom_call.1} parent=1 // pred_check
      _
    $region55: #{tpu_custom_call.1} parent=1 // pred_check_branch
      %662 = sbr.rel (0) target = $region57
    $region56: #{tpu_custom_call.1} parent=1 // pred_region
      %663 = dma.done [#allocation3], 16
    $region57: #{tpu_custom_call.1} parent=1 // pred_fallthru
      _
    // Predicated region
    $region58: #{tpu_custom_call.1} parent=1 // pred_check
      _
    $region59: #{tpu_custom_call.1} parent=1 // pred_check_branch
      %665 = sbr.rel (0) target = $region61
    $region60: #{tpu_custom_call.1} parent=1 // pred_region
      %666 = dma.done [#allocation5], 128
    $region61: #{tpu_custom_call.1} parent=1 // pred_fallthru
      _
    // Predicated region
    $region62: #{tpu_custom_call.1} parent=1 // pred_check
      _
    $region63: #{tpu_custom_call.1} parent=1 // pred_check_branch
      %668 = sbr.rel (0) target = $region65
    $region64: #{tpu_custom_call.1} parent=1 // pred_region
      %669 = dma.done [#allocation5], 512
    $region65: #{tpu_custom_call.1} parent=1 // pred_fallthru
      _
    %670 = vsyncpa [#allocation3], 1
    %671 = vsyncpa [#allocation5], 1

</llo_original>
